<compile_context>
chip_gen: v7x
topology: tpu7x:2x2x1
jax: 0.10.0
libtpu: 0.0.40
codegen_flags: <defaults>
</compile_context>

<pallas_src>
import functools

import jax
import jax.numpy as jnp
from jax import lax
from jax.experimental import pallas as pl
from jax.experimental.pallas import tpu as pltpu

_INV_SQRT2 = 0.7071067811865475


def _gelu_exact_f32(x_f32):
    # PyTorch nn.GELU() default: exact erf-based GELU, computed in f32.
    return 0.5 * x_f32 * (1.0 + lax.erf(x_f32 * _INV_SQRT2))


# ---------------------------------------------------------------------------
# Kernels
# ---------------------------------------------------------------------------
def ffn_fused_kernel(x_ref, w1_ref, b1_ref, w2_ref, b2_ref, o_ref):
    """Fully fused path: full (padded) hidden dim resident in VMEM.

    Grid: (M tiles,) [parallel].  Weights/biases use a constant index_map so
    they are DMA'd once and stay resident across all M tiles.
    """
    h = jnp.dot(x_ref[...], w1_ref[...], preferred_element_type=jnp.float32)
    h = _gelu_exact_f32(h + b1_ref[...].astype(jnp.float32))
    y = jnp.dot(h.astype(w2_ref.dtype), w2_ref[...],
                preferred_element_type=jnp.float32)
    o_ref[...] = (y + b2_ref[...].astype(jnp.float32)).astype(o_ref.dtype)


def ffn_tiled_kernel(x_ref, w1_ref, b1_ref, w2_ref, b2_ref, o_ref, acc_ref):
    """Hidden-tiled path for weights too large for VMEM.

    Grid: (M tiles [parallel], hidden tiles [arbitrary/reduction]).
    GELU is elementwise over hidden, so per-hidden-tile accumulation is exact.
    """
    k = pl.program_id(1)

    @pl.when(k == 0)
    def _():
        acc_ref[...] = jnp.zeros_like(acc_ref)

    h = jnp.dot(x_ref[...], w1_ref[...], preferred_element_type=jnp.float32)
    h = _gelu_exact_f32(h + b1_ref[...].astype(jnp.float32))
    acc_ref[...] += jnp.dot(h.astype(w2_ref.dtype), w2_ref[...],
                            preferred_element_type=jnp.float32)

    @pl.when(k == pl.num_programs(1) - 1)
    def _():
        y = acc_ref[...] + b2_ref[...].astype(jnp.float32)
        o_ref[...] = y.astype(o_ref.dtype)  # single cast at the store


# ---------------------------------------------------------------------------
# Host-side helpers
# ---------------------------------------------------------------------------
def _round_up(x, m):
    return (x + m - 1) // m * m


@functools.lru_cache(maxsize=1)
def _vmem_budget_bytes():
    """Usable VMEM budget (bytes): physical capacity minus ~16 MiB headroom."""
    cap = None
    try:
        cap = getattr(pltpu.get_tpu_info(), "vmem_capacity_bytes", None)
    except Exception:
        cap = None
    if cap is None:
        try:
            kind = jax.devices()[0].device_kind.lower()
            cap = 64 * 1024 * 1024 if "v7" in kind else 128 * 1024 * 1024
        except Exception:
            cap = 64 * 1024 * 1024  # conservative fallback
    return max(32 * 1024 * 1024, int(cap) - 16 * 1024 * 1024)


def _maybe_pad2(a, rows, cols):
    pr, pc = rows - a.shape[0], cols - a.shape[1]
    if pr == 0 and pc == 0:
        return a  # no padded HBM copy when already aligned
    return jnp.pad(a, ((0, pr), (0, pc)))


def _vmem_estimate(tm, th, dim_p, x_bytes, w_bytes, out_bytes, with_acc):
    """Rough per-step VMEM use with double-buffered inputs/outputs."""
    two = 2
    v = two * tm * dim_p * x_bytes           # x tile
    v += two * dim_p * th * w_bytes          # W1 tile
    v += two * 8 * th * w_bytes              # b1 tile (sublane-padded)
    v += two * th * dim_p * w_bytes          # W2 tile
    v += two * 8 * dim_p * w_bytes           # b2 tile
    v += two * tm * dim_p * out_bytes        # out tile
    if with_acc:
        v += tm * dim_p * 4                  # f32 accumulator
    v += tm * th * 4                         # in-kernel f32 hidden intermediate
    v += tm * th * w_bytes                   # cast of hidden for 2nd matmul
    return v


@functools.partial(jax.jit, static_argnames=("tm", "th"))
def feed_forward(x, w1, b1, w2, b2, *, tm=512, th=1024):
    """x: (B, S, dim) -> (B, S, dim). Fused MLP on TPU via Pallas."""
    B, S, dim = x.shape
    hidden = w1.shape[1]
    M = B * S

    x_bytes = jnp.dtype(x.dtype).itemsize
    w_bytes = jnp.dtype(w1.dtype).itemsize
    pack = max(8, 32 // x_bytes)             # sublane pack: 8 f32, 16 bf16, 32 int8

    budget = _vmem_budget_bytes()
    dim_p = _round_up(dim, 128)
    hidden_p_full = _round_up(hidden, 128)

    # --- token-tile selection -------------------------------------------------
    tm_eff = min(tm, _round_up(M, pack))
    # Ensure >=2 M tiles (both v7x TensorCores busy) whenever M has enough rows.
    if M >= 2 * pack and _round_up(M, tm_eff) // tm_eff < 2:
        tm_eff = _round_up((M + 1) // 2, pack)

    def est(tm_, th_, with_acc):
        return _vmem_estimate(tm_, th_, dim_p, x_bytes, w_bytes, x_bytes,
                              with_acc)

    # --- hidden-tile selection ------------------------------------------------
    fused = est(tm_eff, hidden_p_full, with_acc=False) <= budget
    if fused:
        th_eff = hidden_p_full               # weights fully resident, no k loop
    else:
        th_eff = min(th, hidden_p_full)
        while th_eff > 128 and est(tm_eff, th_eff, True) > budget:
            th_eff -= 128                    # shrink th before tm
        while tm_eff > pack and est(tm_eff, th_eff, True) > budget:
            tm_eff = max(pack, _round_up(tm_eff // 2, pack))
        # Prefer a hidden tile that divides the 128-padded hidden (no extra
        # weight padding); 128 always divides it, so this terminates.
        t = th_eff
        while t > 128 and hidden_p_full % t != 0:
            t -= 128
        th_eff = t

    hidden_p = _round_up(hidden, th_eff)     # == hidden_p_full by construction
    m_p = _round_up(M, tm_eff)
    vmem_limit = int(budget)

    # Zero padding keeps the math exact: padded x columns are zero, padded W1
    # columns / b1 entries are zero (gelu(0) == 0), padded W2 rows/cols and b2
    # entries are zero, so padded output columns are zero and padded rows are
    # sliced off below.  Pads are skipped entirely when shapes already align.
    x2 = _maybe_pad2(x.reshape(M, dim), m_p, dim_p)
    w1_p = _maybe_pad2(w1, dim_p, hidden_p)
    b1_p = _maybe_pad2(b1.reshape(1, hidden), 1, hidden_p)
    w2_p = _maybe_pad2(w2, hidden_p, dim_p)
    b2_p = _maybe_pad2(b2.reshape(1, dim), 1, dim_p)

    if fused:
        grid = (m_p // tm_eff,)
        out = pl.pallas_call(
            ffn_fused_kernel,
            out_shape=jax.ShapeDtypeStruct((m_p, dim_p), x.dtype),
            grid_spec=pltpu.PrefetchScalarGridSpec(
                num_scalar_prefetch=0,
                grid=grid,
                in_specs=[
                    pl.BlockSpec((tm_eff, dim_p), lambda i: (i, 0)),     # x tile
                    pl.BlockSpec((dim_p, hidden_p), lambda i: (0, 0)),   # W1 (resident)
                    pl.BlockSpec((1, hidden_p), lambda i: (0, 0)),       # b1
                    pl.BlockSpec((hidden_p, dim_p), lambda i: (0, 0)),   # W2 (resident)
                    pl.BlockSpec((1, dim_p), lambda i: (0, 0)),          # b2
                ],
                out_specs=pl.BlockSpec((tm_eff, dim_p), lambda i: (i, 0)),
            ),
            compiler_params=pltpu.CompilerParams(
                dimension_semantics=("parallel",),
                vmem_limit_bytes=vmem_limit),
        )(x2, w1_p, b1_p, w2_p, b2_p)
    else:
        grid = (m_p // tm_eff, hidden_p // th_eff)
        out = pl.pallas_call(
            ffn_tiled_kernel,
            out_shape=jax.ShapeDtypeStruct((m_p, dim_p), x.dtype),
            grid_spec=pltpu.PrefetchScalarGridSpec(
                num_scalar_prefetch=0,
                grid=grid,
                in_specs=[
                    pl.BlockSpec((tm_eff, dim_p), lambda i, k: (i, 0)),   # x tile
                    pl.BlockSpec((dim_p, th_eff), lambda i, k: (0, k)),   # W1 slice
                    pl.BlockSpec((1, th_eff), lambda i, k: (0, k)),       # b1 slice
                    pl.BlockSpec((th_eff, dim_p), lambda i, k: (k, 0)),   # W2 slice
                    pl.BlockSpec((1, dim_p), lambda i, k: (0, 0)),        # b2
                ],
                out_specs=pl.BlockSpec((tm_eff, dim_p), lambda i, k: (i, 0)),
                scratch_shapes=[pltpu.VMEM((tm_eff, dim_p), jnp.float32)],
            ),
            compiler_params=pltpu.CompilerParams(
                dimension_semantics=("parallel", "arbitrary"),
                vmem_limit_bytes=vmem_limit),
        )(x2, w1_p, b1_p, w2_p, b2_p)

    return out[:M, :dim].reshape(B, S, dim)


# ---------------------------------------------------------------------------
# Params / reference / demo
# ---------------------------------------------------------------------------
def init_feed_forward_params(key, dim, hidden_dim, dtype=jnp.float32):
    """Deterministic init mimicking nn.Linear: U(-1/sqrt(fan_in), +1/sqrt(fan_in))."""
    k1, k2, k3, k4 = jax.random.split(key, 4)
    bound1 = 1.0 / jnp.sqrt(dim)
    bound2 = 1.0 / jnp.sqrt(hidden_dim)
    # stored as (in_features, out_features) so the kernel does x @ W
    w1 = jax.random.uniform(k1, (dim, hidden_dim), dtype, -bound1, bound1)
    b1 = jax.random.uniform(k2, (hidden_dim,), dtype, -bound1, bound1)
    w2 = jax.random.uniform(k3, (hidden_dim, dim), dtype, -bound2, bound2)
    b2 = jax.random.uniform(k4, (dim,), dtype, -bound2, bound2)
    return w1, b1, w2, b2


def feed_forward_ref(x, w1, b1, w2, b2):
    """Pure-JAX reference matching the PyTorch module (dropout p=0 => identity)."""
    h = jnp.einsum("bsd,dh->bsh", x, w1) + b1
    h = 0.5 * h * (1.0 + lax.erf(h / jnp.sqrt(2.0)))
    return jnp.einsum("bsh,hd->bsd", h, w2) + b2


if __name__ == "__main__":
    key = jax.random.PRNGKey(0)
    kx, kp = jax.random.split(key)

    batch, seq, dim, hidden_dim = 2, 8, 32, 64
    x = jax.random.normal(kx, (batch, seq, dim), jnp.float32)
    w1, b1, w2, b2 = init_feed_forward_params(kp, dim, hidden_dim)

    out = feed_forward(x, w1, b1, w2, b2)
    out = jax.block_until_ready(out)

    ref = feed_forward_ref(x, w1, b1, w2, b2)
    assert out.shape == (batch, seq, dim)
    assert jnp.allclose(out, ref, atol=2e-5, rtol=2e-5), "mismatch vs reference"

    print("KERNEL_OK")
</pallas_src>

<mosaic_0001>
module attributes {stable_mosaic.version = 11 : i64} {
  func.func @ffn_fused_kernel(%arg0: i32, %arg1: memref<8x128xf32, #tpu.memory_space<vmem>>, %arg2: memref<128x128xf32, #tpu.memory_space<vmem>>, %arg3: memref<1x128xf32, #tpu.memory_space<vmem>>, %arg4: memref<128x128xf32, #tpu.memory_space<vmem>>, %arg5: memref<1x128xf32, #tpu.memory_space<vmem>>, %arg6: memref<8x128xf32, #tpu.memory_space<vmem>>) attributes {dimension_semantics = [#tpu.dimension_semantics<parallel>], iteration_bounds = array<i64: 2>, scalar_prefetch = 0 : i64, scratch_operands = 0 : i64, tpu.core_type = #tpu.core_type<tc>, window_params = [{transform_indices = @transform_0, window_bounds = array<i64: 8, 128>}, {pipeline_mode = #tpu.pipeline_mode<synchronous>, transform_indices = @transform_1, window_bounds = array<i64: 128, 128>}, {pipeline_mode = #tpu.pipeline_mode<synchronous>, transform_indices = @transform_2, window_bounds = array<i64: 1, 128>}, {pipeline_mode = #tpu.pipeline_mode<synchronous>, transform_indices = @transform_3, window_bounds = array<i64: 128, 128>}, {pipeline_mode = #tpu.pipeline_mode<synchronous>, transform_indices = @transform_4, window_bounds = array<i64: 1, 128>}, {transform_indices = @transform_5, window_bounds = array<i64: 8, 128>}]} {
    %c0 = arith.constant 0 : index
    %c0_0 = arith.constant 0 : index
    %0 = vector.load %arg1[%c0, %c0_0] : memref<8x128xf32, #tpu.memory_space<vmem>>, vector<8x128xf32>
    %c0_1 = arith.constant 0 : index
    %c0_2 = arith.constant 0 : index
    %1 = vector.load %arg2[%c0_1, %c0_2] : memref<128x128xf32, #tpu.memory_space<vmem>>, vector<128x128xf32>
    %cst = arith.constant dense<0.000000e+00> : vector<8x128xf32>
    %2 = tpu.matmul %0, %1, %cst {dimension_numbers = #tpu.dot_dimension_numbers<[1], [0], [0], [1], [0, 0, 1, 1], [], []>} : vector<8x128xf32>, vector<128x128xf32>, vector<8x128xf32> -> vector<8x128xf32>
    %c0_3 = arith.constant 0 : index
    %c0_4 = arith.constant 0 : index
    %3 = vector.load %arg3[%c0_3, %c0_4] : memref<1x128xf32, #tpu.memory_space<vmem>>, vector<1x128xf32>
    %4 = vector.broadcast %3 : vector<1x128xf32> to vector<8x128xf32>
    %5 = arith.addf %2, %4 : vector<8x128xf32>
    %cst_5 = arith.constant 5.000000e-01 : f32
    %6 = vector.broadcast %cst_5 : f32 to vector<8x128xf32>
    %7 = arith.mulf %6, %5 : vector<8x128xf32>
    %cst_6 = arith.constant 0.707106769 : f32
    %8 = vector.broadcast %cst_6 : f32 to vector<8x128xf32>
    %9 = arith.mulf %5, %8 : vector<8x128xf32>
    %10 = math.erf %9 : vector<8x128xf32>
    %cst_7 = arith.constant 1.000000e+00 : f32
    %11 = vector.broadcast %cst_7 : f32 to vector<8x128xf32>
    %12 = arith.addf %11, %10 : vector<8x128xf32>
    %13 = arith.mulf %7, %12 : vector<8x128xf32>
    %c0_8 = arith.constant 0 : index
    %c0_9 = arith.constant 0 : index
    %14 = vector.load %arg4[%c0_8, %c0_9] : memref<128x128xf32, #tpu.memory_space<vmem>>, vector<128x128xf32>
    %cst_10 = arith.constant dense<0.000000e+00> : vector<8x128xf32>
    %15 = tpu.matmul %13, %14, %cst_10 {dimension_numbers = #tpu.dot_dimension_numbers<[1], [0], [0], [1], [0, 0, 1, 1], [], []>} : vector<8x128xf32>, vector<128x128xf32>, vector<8x128xf32> -> vector<8x128xf32>
    %c0_11 = arith.constant 0 : index
    %c0_12 = arith.constant 0 : index
    %16 = vector.load %arg5[%c0_11, %c0_12] : memref<1x128xf32, #tpu.memory_space<vmem>>, vector<1x128xf32>
    %17 = vector.broadcast %16 : vector<1x128xf32> to vector<8x128xf32>
    %18 = arith.addf %15, %17 : vector<8x128xf32>
    %c0_13 = arith.constant 0 : index
    %c0_14 = arith.constant 0 : index
    %19 = vector.load %arg6[%c0_13, %c0_14] : memref<8x128xf32, #tpu.memory_space<vmem>>, vector<8x128xf32>
    tpu.vector_store %arg6[%c0_13, %c0_14], %18 {strides = array<i32>} : memref<8x128xf32, #tpu.memory_space<vmem>>, vector<8x128xf32>,
    return
  }
  func.func @transform_0(%arg0: i32) -> (i32, i32) {
    %c0_i32 = arith.constant 0 : i32
    %c0_i32_0 = arith.constant 0 : i32
    return %arg0, %c0_i32 : i32, i32
  }
  func.func @transform_1(%arg0: i32) -> (i32, i32) {
    %c0_i32 = arith.constant 0 : i32
    %c0_i32_0 = arith.constant 0 : i32
    %c0_i32_1 = arith.constant 0 : i32
    return %c0_i32, %c0_i32_0 : i32, i32
  }
  func.func @transform_2(%arg0: i32) -> (i32, i32) {
    %c0_i32 = arith.constant 0 : i32
    %c0_i32_0 = arith.constant 0 : i32
    %c0_i32_1 = arith.constant 0 : i32
    return %c0_i32, %c0_i32_0 : i32, i32
  }
  func.func @transform_3(%arg0: i32) -> (i32, i32) {
    %c0_i32 = arith.constant 0 : i32
    %c0_i32_0 = arith.constant 0 : i32
    %c0_i32_1 = arith.constant 0 : i32
    return %c0_i32, %c0_i32_0 : i32, i32
  }
  func.func @transform_4(%arg0: i32) -> (i32, i32) {
    %c0_i32 = arith.constant 0 : i32
    %c0_i32_0 = arith.constant 0 : i32
    %c0_i32_1 = arith.constant 0 : i32
    return %c0_i32, %c0_i32_0 : i32, i32
  }
  func.func @transform_5(%arg0: i32) -> (i32, i32) {
    %c0_i32 = arith.constant 0 : i32
    %c0_i32_0 = arith.constant 0 : i32
    return %arg0, %c0_i32 : i32, i32
  }
}

</mosaic_0001>

<llo_original>
// kernel: feed_forward.1
$region0: #{feed_forward.1}
  #allocation0 [shape = 'u32[]', space=smem, size = 0x4, offset = 0x4, fixed_abs, tag = 'smem constant byte address 0x4 - core index']
  #allocation1 [shape = 'u32[144,128]{1,0:T(1,128)}', space=vmem, size = 0x12000, scoped, tag = 'internal scratch']
  %s0 = inlined_call_operand.hbm [shape: f32[16,128], index: 0, kind: input, shape index: {}]
  %s1 = inlined_call_operand.hbm [shape: f32[128,128], index: 1, kind: input, shape index: {}]
  %s2 = inlined_call_operand.hbm [shape: f32[1,128], index: 2, kind: input, shape index: {}]
  %s3 = inlined_call_operand.hbm [shape: f32[128,128], index: 3, kind: input, shape index: {}]
  %s4 = inlined_call_operand.hbm [shape: f32[1,128], index: 4, kind: input, shape index: {}]
  %s5 = inlined_call_operand.hbm [shape: f32[16,128], index: 5, kind: output, shape index: {}]
  %s6 = sld [smem:[#allocation0]]
  $region73: #{feed_forward.1} parent=0
    _
  %s8 = ssub.s32 1, %s6
  %s9 = scalar_select 0, %s8, %s6
  $region1: #{feed_forward.1} parent=0
    #allocation2 [shape = 'u8[8192]{0}', space=vmem, size = 0x2000, scoped, tag = 'input window, operand 0']
    #allocation3 [shape = 's32[2]{0}', space=sflag, size = 0x8, scoped, tag = 'scoped memory for feed_forward.1']
    #allocation4 [shape = 's32[2]{0}', space=sflag, size = 0x8, scoped, tag = 'scoped memory for feed_forward.1']
    #allocation5 [shape = 'u8[65536]{0}', space=vmem, size = 0x10000, scoped, tag = 'input window, operand 1, single buffered']
    #allocation6 [shape = 's32[1]{0}', space=sflag, size = 0x4, scoped, tag = 'scoped memory for feed_forward.1']
    #allocation7 [shape = 'u8[512]{0}', space=vmem, size = 0x400, scoped, tag = 'input window, operand 2, single buffered']
    #allocation8 [shape = 'u8[65536]{0}', space=vmem, size = 0x10000, scoped, tag = 'input window, operand 3, single buffered']
    #allocation9 [shape = 's32[1]{0}', space=sflag, size = 0x4, scoped, tag = 'scoped memory for feed_forward.1']
    #allocation10 [shape = 'u8[512]{0}', space=vmem, size = 0x400, scoped, tag = 'input window, operand 4, single buffered']
    #allocation11 [shape = 'u8[8192]{0}', space=vmem, size = 0x2000, scoped, tag = 'output window, operand 0']
    %10 = vsyncpa [#allocation3], 0
    %s11 = scalar_lea.sflag [#allocation3], 1
    %12 = vsyncpa %s11, 0
    %13 = vsyncpa [#allocation6], 0
    %14 = vsyncpa [#allocation9], 0
    %15 = vsyncpa [#allocation4], 0
    %s16 = scalar_lea.sflag [#allocation4], 1
    %17 = vsyncpa %s16, 0
    loop: start=0, step=1, limit=4
    $region2: #{feed_forward.1} parent=1 // loop_pre_header
      _
    $region3: #{feed_forward.1} parent=1 // loop_header
      %s19 = sphi 0, %s23
      %p20 = scmp.ge.s32.totalorder %s19, 4
      %s29 = sphi 0, %s31
      %s32 = sphi 0, %s29
      %s33 = sphi 0, %s32
      %s49 = sphi 0, %s33
      %s53 = sphi 0, %s53
      %s55 = sphi 0, %s53
      %s56 = sphi 0, %s55
      %s70 = sphi 0, %s56
      %s74 = sphi 0, %s74
      %s76 = sphi 0, %s74
      %s77 = sphi 0, %s76
      %s91 = sphi 0, %s77
      %s95 = sphi 0, %s95
      %s97 = sphi 0, %s95
      %s98 = sphi 0, %s97
      %s112 = sphi 0, %s98
      %s116 = sphi 0, %s116
      %s118 = sphi 0, %s116
      %s119 = sphi 0, %s118
      %s133 = sphi 0, %s119
      %s139 = sphi 0, %s141
      %s142 = sphi 0, %s139
      %s143 = sphi 0, %s142
      %s159 = sphi 0, %s143
    $region4: #{feed_forward.1} parent=1 // loop_header_branch
      %22 = sbr.rel (%p20) target = $region8
    $region5: #{feed_forward.1} parent=1 // loop_body
      %s24 = ssub.s32 %s19, 1
      %s25 = ssub.s32 %s19, 2
      %s26 = sadd.s32 %s19, 1
      %s27 = ssub.s32 %s19, %s26
      %p28 = scmp.eq.s32.totalorder %s27, 0
      %s30 = sadd.s32 %s29, 1
      %s31 = scalar_select %p28, %s29, %s30
      %p34 = pneg %p28
      %p35 = scmp.eq.s32.totalorder %s19, 1
      %p36 = por %p34, %p35
      %p37 = scmp.ne.s32.totalorder %s29, %s32
      %p38 = scmp.eq.s32.totalorder %s19, 0
      %p39 = por %p37, %p38
      %p40 = scmp.ne.s32.totalorder %s29, %s32
      %p41 = scmp.eq.s32.totalorder %s24, 1
      %p42 = por %p40, %p41
      %p43 = scmp.ne.s32.totalorder %s32, %s33
      %p44 = scmp.eq.s32.totalorder %s24, 0
      %p45 = por %p43, %p44
      %p46 = scmp.ne.s32.totalorder %s32, %s33
      %p47 = scmp.eq.s32.totalorder %s25, 1
      %p48 = por %p46, %p47
      %p50 = scmp.ne.s32.totalorder %s33, %s49
      %p51 = scmp.eq.s32.totalorder %s25, 0
      %p52 = por %p50, %p51
      %s54 = sadd.s32 %s53, 1
      %p57 = scmp.eq.s32.totalorder %s19, 1
      %p58 = scmp.ne.s32.totalorder %s53, %s55
      %p59 = scmp.eq.s32.totalorder %s19, 0
      %p60 = por %p58, %p59
      %p61 = scmp.ne.s32.totalorder %s53, %s55
      %p62 = scmp.eq.s32.totalorder %s24, 1
      %p63 = por %p61, %p62
      %p64 = scmp.ne.s32.totalorder %s55, %s56
      %p65 = scmp.eq.s32.totalorder %s24, 0
      %p66 = por %p64, %p65
      %p67 = scmp.ne.s32.totalorder %s55, %s56
      %p68 = scmp.eq.s32.totalorder %s25, 1
      %p69 = por %p67, %p68
      %p71 = scmp.ne.s32.totalorder %s56, %s70
      %p72 = scmp.eq.s32.totalorder %s25, 0
      %p73 = por %p71, %p72
      %s75 = sadd.s32 %s74, 1
      %p78 = scmp.eq.s32.totalorder %s19, 1
      %p79 = scmp.ne.s32.totalorder %s74, %s76
      %p80 = scmp.eq.s32.totalorder %s19, 0
      %p81 = por %p79, %p80
      %p82 = scmp.ne.s32.totalorder %s74, %s76
      %p83 = scmp.eq.s32.totalorder %s24, 1
      %p84 = por %p82, %p83
      %p85 = scmp.ne.s32.totalorder %s76, %s77
      %p86 = scmp.eq.s32.totalorder %s24, 0
      %p87 = por %p85, %p86
      %p88 = scmp.ne.s32.totalorder %s76, %s77
      %p89 = scmp.eq.s32.totalorder %s25, 1
      %p90 = por %p88, %p89
      %p92 = scmp.ne.s32.totalorder %s77, %s91
      %p93 = scmp.eq.s32.totalorder %s25, 0
      %p94 = por %p92, %p93
      %s96 = sadd.s32 %s95, 1
      %p99 = scmp.eq.s32.totalorder %s19, 1
      %p100 = scmp.ne.s32.totalorder %s95, %s97
      %p101 = scmp.eq.s32.totalorder %s19, 0
      %p102 = por %p100, %p101
      %p103 = scmp.ne.s32.totalorder %s95, %s97
      %p104 = scmp.eq.s32.totalorder %s24, 1
      %p105 = por %p103, %p104
      %p106 = scmp.ne.s32.totalorder %s97, %s98
      %p107 = scmp.eq.s32.totalorder %s24, 0
      %p108 = por %p106, %p107
      %p109 = scmp.ne.s32.totalorder %s97, %s98
      %p110 = scmp.eq.s32.totalorder %s25, 1
      %p111 = por %p109, %p110
      %p113 = scmp.ne.s32.totalorder %s98, %s112
      %p114 = scmp.eq.s32.totalorder %s25, 0
      %p115 = por %p113, %p114
      %s117 = sadd.s32 %s116, 1
      %p120 = scmp.eq.s32.totalorder %s19, 1
      %p121 = scmp.ne.s32.totalorder %s116, %s118
      %p122 = scmp.eq.s32.totalorder %s19, 0
      %p123 = por %p121, %p122
      %p124 = scmp.ne.s32.totalorder %s116, %s118
      %p125 = scmp.eq.s32.totalorder %s24, 1
      %p126 = por %p124, %p125
      %p127 = scmp.ne.s32.totalorder %s118, %s119
      %p128 = scmp.eq.s32.totalorder %s24, 0
      %p129 = por %p127, %p128
      %p130 = scmp.ne.s32.totalorder %s118, %s119
      %p131 = scmp.eq.s32.totalorder %s25, 1
      %p132 = por %p130, %p131
      %p134 = scmp.ne.s32.totalorder %s119, %s133
      %p135 = scmp.eq.s32.totalorder %s25, 0
      %p136 = por %p134, %p135
      %s137 = ssub.s32 %s19, %s26
      %p138 = scmp.eq.s32.totalorder %s137, 0
      %s140 = sadd.s32 %s139, 1
      %s141 = scalar_select %p138, %s139, %s140
      %p144 = pneg %p138
      %p145 = scmp.eq.s32.totalorder %s19, 1
      %p146 = por %p144, %p145
      %p147 = scmp.ne.s32.totalorder %s139, %s142
      %p148 = scmp.eq.s32.totalorder %s19, 0
      %p149 = por %p147, %p148
      %p150 = scmp.ne.s32.totalorder %s139, %s142
      %p151 = scmp.eq.s32.totalorder %s24, 1
      %p152 = por %p150, %p151
      %p153 = scmp.ne.s32.totalorder %s142, %s143
      %p154 = scmp.eq.s32.totalorder %s24, 0
      %p155 = por %p153, %p154
      %p156 = scmp.ne.s32.totalorder %s142, %s143
      %p157 = scmp.eq.s32.totalorder %s25, 1
      %p158 = por %p156, %p157
      %p160 = scmp.ne.s32.totalorder %s143, %s159
      %p161 = scmp.eq.s32.totalorder %s25, 0
      %p162 = por %p160, %p161
      %p163 = scmp.le.s32.totalorder 1, %s19
      %p164 = scmp.lt.s32.totalorder %s19, 3
      %p165 = pnand %p163, %p164
      %p166 = pneg %p165
      // Predicated region
      $region9: #{feed_forward.1} parent=5 // pred_check
        _
      $region10: #{feed_forward.1} parent=5 // pred_check_branch
        %168 = sbr.rel (%p165) target = $region12
      $region11: #{feed_forward.1} parent=5 // pred_region
        %s169 = ssub.s32 %s19, 1
        // Predicated region
        $region13: #{feed_forward.1} parent=11 // pred_check
          %p170 = pneg %p66
        $region14: #{feed_forward.1} parent=11 // pred_check_branch
          %172 = sbr.rel (%p170) target = $region16
        $region15: #{feed_forward.1} parent=11 // pred_region
          %s174 = ssub.s32 2048, 2048
          %175 = vsyncadd [#allocation6], %s174
          %s176 = sshll.u32 [#allocation5], 4
          %s177 = int_to_ptr.vmem [resolvable:$true] %s176
          %182 = dma.hbm_to_vmem [thread:$0]  %s1, 2048, %s177, [#allocation6], 128, 128, 8
        $region16: #{feed_forward.1} parent=11 // pred_fallthru
          _
        // Predicated region
        $region17: #{feed_forward.1} parent=11 // pred_check
          %p183 = pneg %p87
        $region18: #{feed_forward.1} parent=11 // pred_check_branch
          %185 = sbr.rel (%p183) target = $region20
        $region19: #{feed_forward.1} parent=11 // pred_region
          %s187 = ssub.s32 16, 16
          %188 = vsyncadd [#allocation6], %s187
          %s190 = sshll.u32 [#allocation7], 4
          %s191 = int_to_ptr.vmem [resolvable:$true] %s190
          %193 = dma.hbm_to_vmem [thread:$0]  %s2, 16, %s191, [#allocation6]
        $region20: #{feed_forward.1} parent=11 // pred_fallthru
          _
        // Predicated region
        $region21: #{feed_forward.1} parent=11 // pred_check
          %p194 = pneg %p108
        $region22: #{feed_forward.1} parent=11 // pred_check_branch
          %196 = sbr.rel (%p194) target = $region24
        $region23: #{feed_forward.1} parent=11 // pred_region
          %s198 = ssub.s32 2048, 2048
          %199 = vsyncadd [#allocation9], %s198
          %s200 = sshll.u32 [#allocation8], 4
          %s201 = int_to_ptr.vmem [resolvable:$true] %s200
          %206 = dma.hbm_to_vmem [thread:$0]  %s3, 2048, %s201, [#allocation9], 128, 128, 8
        $region24: #{feed_forward.1} parent=11 // pred_fallthru
          _
        // Predicated region
        $region25: #{feed_forward.1} parent=11 // pred_check
          %p207 = pneg %p129
        $region26: #{feed_forward.1} parent=11 // pred_check_branch
          %209 = sbr.rel (%p207) target = $region28
        $region27: #{feed_forward.1} parent=11 // pred_region
          %s211 = ssub.s32 16, 16
          %212 = vsyncadd [#allocation9], %s211
          %s214 = sshll.u32 [#allocation10], 4
          %s215 = int_to_ptr.vmem [resolvable:$true] %s214
          %217 = dma.hbm_to_vmem [thread:$0]  %s4, 16, %s215, [#allocation9]
        $region28: #{feed_forward.1} parent=11 // pred_fallthru
          _
      $region12: #{feed_forward.1} parent=5 // pred_fallthru
        _
      %p218 = scmp.lt.s32.totalorder %s19, 2
      // Predicated region
      $region29: #{feed_forward.1} parent=5 // pred_check
        %p219 = pneg %p218
      $region30: #{feed_forward.1} parent=5 // pred_check_branch
        %221 = sbr.rel (%p219) target = $region32
      $region31: #{feed_forward.1} parent=5 // pred_region
        // Predicated region
        $region33: #{feed_forward.1} parent=31 // pred_check
          %p222 = pneg %p39
        $region34: #{feed_forward.1} parent=31 // pred_check_branch
          %224 = sbr.rel (%p222) target = $region36
        $region35: #{feed_forward.1} parent=31 // pred_region
          %s225 = sand.u32 %s29, 1
          %s226 = scalar_lea.sflag [#allocation3], %s225
          %s227 = sand.u32 %s29, 1
          %s228 = smul.addr %s227, 8
          %s229 = scalar_lea.vmem [#allocation2], %s228
          %s231 = ssub.s32 128, 128
          %232 = vsyncadd %s226, %s231
          %s233 = smul.addr %s19, 128
          %s234 = scalar_lea.hbm %s0, %s233
          %s236 = sshll.u32 %s229, 4
          %s237 = int_to_ptr.vmem [resolvable:$true] %s236
          %239 = dma.hbm_to_vmem [thread:$0]  %s234, 128, %s237, %s226
        $region36: #{feed_forward.1} parent=31 // pred_fallthru
          _
      $region32: #{feed_forward.1} parent=5 // pred_fallthru
        _
      %p240 = scmp.le.s32.totalorder 1, %s19
      %p241 = scmp.lt.s32.totalorder %s19, 3
      %p242 = pnand %p240, %p241
      %p243 = pneg %p242
      // Predicated region
      $region37: #{feed_forward.1} parent=5 // pred_check
        _
      $region38: #{feed_forward.1} parent=5 // pred_check_branch
        %245 = sbr.rel (%p242) target = $region40
      $region39: #{feed_forward.1} parent=5 // pred_region
        %s246 = ssub.s32 %s19, 1
        %s247 = sand.u32 %s32, 1
        %s248 = scalar_lea.sflag [#allocation3], %s247
        %s249 = sand.u32 %s32, 1
        %s250 = smul.addr %s249, 8
        %s251 = scalar_lea.vmem [#allocation2], %s250
        // Predicated region
        $region41: #{feed_forward.1} parent=39 // pred_check
          %p252 = pneg %p45
        $region42: #{feed_forward.1} parent=39 // pred_check_branch
          %254 = sbr.rel (%p252) target = $region44
        $region43: #{feed_forward.1} parent=39 // pred_region
          %255 = dma.done %s248, 128
        $region44: #{feed_forward.1} parent=39 // pred_fallthru
          _
        // Predicated region
        $region45: #{feed_forward.1} parent=39 // pred_check
          %p256 = pneg %p66
        $region46: #{feed_forward.1} parent=39 // pred_check_branch
          %258 = sbr.rel (%p256) target = $region48
        $region47: #{feed_forward.1} parent=39 // pred_region
          %259 = dma.done [#allocation6], 2048
        $region48: #{feed_forward.1} parent=39 // pred_fallthru
          _
        // Predicated region
        $region49: #{feed_forward.1} parent=39 // pred_check
          %p260 = pneg %p87
        $region50: #{feed_forward.1} parent=39 // pred_check_branch
          %262 = sbr.rel (%p260) target = $region52
        $region51: #{feed_forward.1} parent=39 // pred_region
          %263 = dma.done [#allocation6], 16
        $region52: #{feed_forward.1} parent=39 // pred_fallthru
          _
        // Predicated region
        $region53: #{feed_forward.1} parent=39 // pred_check
          %p264 = pneg %p108
        $region54: #{feed_forward.1} parent=39 // pred_check_branch
          %266 = sbr.rel (%p264) target = $region56
        $region55: #{feed_forward.1} parent=39 // pred_region
          %267 = dma.done [#allocation9], 2048
        $region56: #{feed_forward.1} parent=39 // pred_fallthru
          _
        // Predicated region
        $region57: #{feed_forward.1} parent=39 // pred_check
          %p268 = pneg %p129
        $region58: #{feed_forward.1} parent=39 // pred_check_branch
          %270 = sbr.rel (%p268) target = $region60
        $region59: #{feed_forward.1} parent=39 // pred_region
          %271 = dma.done [#allocation9], 16
        $region60: #{feed_forward.1} parent=39 // pred_fallthru
          _
        %s272 = sand.u32 %s32, 1
        %s273 = scalar_lea.sflag [#allocation3], %s272
        %s274 = sand.u32 %s32, 1
        %s275 = smul.addr %s274, 8
        %s276 = scalar_lea.vmem [#allocation2], %s275
        %p277 = pneg %p45
        %p278 = pneg %p42
        %p279 = pneg %p66
        %p280 = pneg %p63
        %p281 = pneg %p87
        %p282 = pneg %p84
        %p283 = pneg %p108
        %p284 = pneg %p105
        %p285 = pneg %p129
        %p286 = pneg %p126
        %p287 = pneg %p155
        %p288 = pneg %p152
        %s289 = sand.u32 %s142, 1
        %s290 = scalar_lea.sflag [#allocation4], %s289
        %s291 = sand.u32 %s142, 1
        %s292 = smul.addr %s291, 8
        %s293 = scalar_lea.vmem [#allocation11], %s292
        %v294 = vld [vmem:[%s251] sm:$0xff]
        %v295 = vld [vmem:[#allocation5] sm:$0xff]
        %v296 = vld [vmem:[#allocation5 + $0x8] sm:$0xff]
        %v297 = vld [vmem:[#allocation5 + $0x10] sm:$0xff]
        %v298 = vld [vmem:[#allocation5 + $0x18] sm:$0xff]
        %v299 = vld [vmem:[#allocation5 + $0x20] sm:$0xff]
        %v300 = vld [vmem:[#allocation5 + $0x28] sm:$0xff]
        %v301 = vld [vmem:[#allocation5 + $0x30] sm:$0xff]
        %v302 = vld [vmem:[#allocation5 + $0x38] sm:$0xff]
        %v303 = vld [vmem:[#allocation5 + $0x40] sm:$0xff]
        %v304 = vld [vmem:[#allocation5 + $0x48] sm:$0xff]
        %v305 = vld [vmem:[#allocation5 + $0x50] sm:$0xff]
        %v306 = vld [vmem:[#allocation5 + $0x58] sm:$0xff]
        %v307 = vld [vmem:[#allocation5 + $0x60] sm:$0xff]
        %v308 = vld [vmem:[#allocation5 + $0x68] sm:$0xff]
        %v309 = vld [vmem:[#allocation5 + $0x70] sm:$0xff]
        %v310 = vld [vmem:[#allocation5 + $0x78] sm:$0xff]
        %v311 = vld [vmem:[#allocation7] sm:$0x1]
        %v313 = vlaneseq
        %v314 = vshrl.u32 %v313, 7
        %v315 = vsub.s32 0, %v314
        %v316 = vrot.slane %v311, %v315
        %318 = vmatprep.subr.mxu0 0.0
        %319 = vmatpush1.msra.mxu0 %v295
        %320 = vmatprep.subr.mxu0 0.0
        %321 = vmatpush1.msra.mxu0 %v296
        %322 = vmatprep.subr.mxu0 0.0
        %323 = vmatpush1.msra.mxu0 %v297
        %324 = vmatprep.subr.mxu0 0.0
        %325 = vmatpush1.msra.mxu0 %v298
        %326 = vmatprep.subr.mxu0 0.0
        %327 = vmatpush1.msra.mxu0 %v299
        %328 = vmatprep.subr.mxu0 0.0
        %329 = vmatpush1.msra.mxu0 %v300
        %330 = vmatprep.subr.mxu0 0.0
        %331 = vmatpush1.msra.mxu0 %v301
        %332 = vmatprep.subr.mxu0 0.0
        %333 = vmatpush1.msra.mxu0 %v302
        %334 = vmatprep.subr.mxu0 0.0
        %335 = vmatpush1.msra.mxu0 %v303
        %336 = vmatprep.subr.mxu0 0.0
        %337 = vmatpush1.msra.mxu0 %v304
        %338 = vmatprep.subr.mxu0 0.0
        %339 = vmatpush1.msra.mxu0 %v305
        %340 = vmatprep.subr.mxu0 0.0
        %341 = vmatpush1.msra.mxu0 %v306
        %342 = vmatprep.subr.mxu0 0.0
        %343 = vmatpush1.msra.mxu0 %v307
        %344 = vmatprep.subr.mxu0 0.0
        %345 = vmatpush1.msra.mxu0 %v308
        %346 = vmatprep.subr.mxu0 0.0
        %347 = vmatpush1.msra.mxu0 %v309
        %348 = vmatprep.subr.mxu0 0.0
        %349 = vmatpush1.msra.mxu0 %v310
        %350 = vmatprep.subr.mxu0 0.0
        %351 = vmatpush1.msra.mxu0 0.0
        %352 = vmatprep.subr.mxu0 0.0
        %353 = vmatpush1.msra.mxu0 0.0
        %354 = vmatprep.subr.mxu0 0.0
        %355 = vmatpush1.msra.mxu0 0.0
        %356 = vmatprep.subr.mxu0 0.0
        %357 = vmatpush1.msra.mxu0 0.0
        %358 = vmatprep.subr.mxu0 0.0
        %359 = vmatpush1.msra.mxu0 0.0
        %360 = vmatprep.subr.mxu0 0.0
        %361 = vmatpush1.msra.mxu0 0.0
        %362 = vmatprep.subr.mxu0 0.0
        %363 = vmatpush1.msra.mxu0 0.0
        %364 = vmatprep.subr.mxu0 0.0
        %365 = vmatpush1.msra.mxu0 0.0
        %366 = vmatprep.subr.mxu0 0.0
        %367 = vmatpush1.msra.mxu0 0.0
        %368 = vmatprep.subr.mxu0 0.0
        %369 = vmatpush1.msra.mxu0 0.0
        %370 = vmatprep.subr.mxu0 0.0
        %371 = vmatpush1.msra.mxu0 0.0
        %372 = vmatprep.subr.mxu0 0.0
        %373 = vmatpush1.msra.mxu0 0.0
        %374 = vmatprep.subr.mxu0 0.0
        %375 = vmatpush1.msra.mxu0 0.0
        %376 = vmatprep.subr.mxu0 0.0
        %377 = vmatpush1.msra.mxu0 0.0
        %378 = vmatprep.subr.mxu0 0.0
        %379 = vmatpush1.msra.mxu0 0.0
        %380 = vmatprep.subr.mxu0 0.0
        %381 = vmatpush1.msra.mxu0 0.0
        %382 = vmatprep.mubr.f32.mxu0 0.0
        %383 = vmatmul.mubr.f32.gmra.mrb[0].mxu0 %v294
        %v384 = vpop.f32.mrb[0].mxu0
        %v385 = vadd.f32 %v316, %v384
        %v386 = vpop.f32.mrb[0].mxu0
        %387 = vdwg.mxu0
        %v388 = vmul.f32 %v385, 0.5
        %v389 = vmul.f32 %v385, 0.70710677
        %v390 = verf.f32.pop %v389
        %v391 = vadd.f32 %v390, 1.0
        %v392 = vmul.f32 %v388, %v391
        %v393 = vld [vmem:[#allocation8] sm:$0xff]
        %v394 = vld [vmem:[#allocation8 + $0x8] sm:$0xff]
        %v395 = vld [vmem:[#allocation8 + $0x10] sm:$0xff]
        %v396 = vld [vmem:[#allocation8 + $0x18] sm:$0xff]
        %v397 = vld [vmem:[#allocation8 + $0x20] sm:$0xff]
        %v398 = vld [vmem:[#allocation8 + $0x28] sm:$0xff]
        %v399 = vld [vmem:[#allocation8 + $0x30] sm:$0xff]
        %v400 = vld [vmem:[#allocation8 + $0x38] sm:$0xff]
        %v401 = vld [vmem:[#allocation8 + $0x40] sm:$0xff]
        %v402 = vld [vmem:[#allocation8 + $0x48] sm:$0xff]
        %v403 = vld [vmem:[#allocation8 + $0x50] sm:$0xff]
        %v404 = vld [vmem:[#allocation8 + $0x58] sm:$0xff]
        %v405 = vld [vmem:[#allocation8 + $0x60] sm:$0xff]
        %v406 = vld [vmem:[#allocation8 + $0x68] sm:$0xff]
        %v407 = vld [vmem:[#allocation8 + $0x70] sm:$0xff]
        %v408 = vld [vmem:[#allocation8 + $0x78] sm:$0xff]
        %v409 = vld [vmem:[#allocation10] sm:$0x1]
        %v411 = vlaneseq
        %v412 = vshrl.u32 %v411, 7
        %v413 = vsub.s32 0, %v412
        %v414 = vrot.slane %v409, %v413
        %416 = vmatprep.subr.mxu0 0.0
        %417 = vmatpush1.msra.mxu0 %v393
        %418 = vmatprep.subr.mxu0 0.0
        %419 = vmatpush1.msra.mxu0 %v394
        %420 = vmatprep.subr.mxu0 0.0
        %421 = vmatpush1.msra.mxu0 %v395
        %422 = vmatprep.subr.mxu0 0.0
        %423 = vmatpush1.msra.mxu0 %v396
        %424 = vmatprep.subr.mxu0 0.0
        %425 = vmatpush1.msra.mxu0 %v397
        %426 = vmatprep.subr.mxu0 0.0
        %427 = vmatpush1.msra.mxu0 %v398
        %428 = vmatprep.subr.mxu0 0.0
        %429 = vmatpush1.msra.mxu0 %v399
        %430 = vmatprep.subr.mxu0 0.0
        %431 = vmatpush1.msra.mxu0 %v400
        %432 = vmatprep.subr.mxu0 0.0
        %433 = vmatpush1.msra.mxu0 %v401
        %434 = vmatprep.subr.mxu0 0.0
        %435 = vmatpush1.msra.mxu0 %v402
        %436 = vmatprep.subr.mxu0 0.0
        %437 = vmatpush1.msra.mxu0 %v403
        %438 = vmatprep.subr.mxu0 0.0
        %439 = vmatpush1.msra.mxu0 %v404
        %440 = vmatprep.subr.mxu0 0.0
        %441 = vmatpush1.msra.mxu0 %v405
        %442 = vmatprep.subr.mxu0 0.0
        %443 = vmatpush1.msra.mxu0 %v406
        %444 = vmatprep.subr.mxu0 0.0
        %445 = vmatpush1.msra.mxu0 %v407
        %446 = vmatprep.subr.mxu0 0.0
        %447 = vmatpush1.msra.mxu0 %v408
        %448 = vmatprep.subr.mxu0 0.0
        %449 = vmatpush1.msra.mxu0 0.0
        %450 = vmatprep.subr.mxu0 0.0
        %451 = vmatpush1.msra.mxu0 0.0
        %452 = vmatprep.subr.mxu0 0.0
        %453 = vmatpush1.msra.mxu0 0.0
        %454 = vmatprep.subr.mxu0 0.0
        %455 = vmatpush1.msra.mxu0 0.0
        %456 = vmatprep.subr.mxu0 0.0
        %457 = vmatpush1.msra.mxu0 0.0
        %458 = vmatprep.subr.mxu0 0.0
        %459 = vmatpush1.msra.mxu0 0.0
        %460 = vmatprep.subr.mxu0 0.0
        %461 = vmatpush1.msra.mxu0 0.0
        %462 = vmatprep.subr.mxu0 0.0
        %463 = vmatpush1.msra.mxu0 0.0
        %464 = vmatprep.subr.mxu0 0.0
        %465 = vmatpush1.msra.mxu0 0.0
        %466 = vmatprep.subr.mxu0 0.0
        %467 = vmatpush1.msra.mxu0 0.0
        %468 = vmatprep.subr.mxu0 0.0
        %469 = vmatpush1.msra.mxu0 0.0
        %470 = vmatprep.subr.mxu0 0.0
        %471 = vmatpush1.msra.mxu0 0.0
        %472 = vmatprep.subr.mxu0 0.0
        %473 = vmatpush1.msra.mxu0 0.0
        %474 = vmatprep.subr.mxu0 0.0
        %475 = vmatpush1.msra.mxu0 0.0
        %476 = vmatprep.subr.mxu0 0.0
        %477 = vmatpush1.msra.mxu0 0.0
        %478 = vmatprep.subr.mxu0 0.0
        %479 = vmatpush1.msra.mxu0 0.0
        %480 = vmatprep.mubr.f32.mxu0 0.0
        %481 = vmatmul.mubr.f32.gmra.mrb[0].mxu0 %v392
        %v482 = vpop.f32.mrb[0].mxu0
        %v483 = vadd.f32 %v414, %v482
        %v484 = vpop.f32.mrb[0].mxu0
        %485 = vdwg.mxu0
        %486 = vst [vmem:[%s293] sm:$0xff] %v483
        %s487 = sand.u32 %s142, 1
        %s488 = scalar_lea.sflag [#allocation4], %s487
        %s489 = sand.u32 %s142, 1
        %s490 = smul.addr %s489, 8
        %s491 = scalar_lea.vmem [#allocation11], %s490
        // Predicated region
        $region61: #{feed_forward.1} parent=39 // pred_check
          %p492 = pneg %p152
        $region62: #{feed_forward.1} parent=39 // pred_check_branch
          %494 = sbr.rel (%p492) target = $region64
        $region63: #{feed_forward.1} parent=39 // pred_region
          %s496 = ssub.s32 128, 128
          %497 = vsyncadd %s488, %s496
          %s498 = smul.addr %s24, 128
          %s499 = scalar_lea.hbm %s5, %s498
          %s501 = sshll.u32 %s491, 4
          %s502 = int_to_ptr.vmem [resolvable:$true] %s501
          %504 = dma.vmem_to_hbm [thread:$0]  %s502, 128, %s499, %s488
        $region64: #{feed_forward.1} parent=39 // pred_fallthru
          _
      $region40: #{feed_forward.1} parent=5 // pred_fallthru
        _
      %p505 = scmp.le.s32.totalorder 2, %s19
      // Predicated region
      $region65: #{feed_forward.1} parent=5 // pred_check
        %p506 = pneg %p505
      $region66: #{feed_forward.1} parent=5 // pred_check_branch
        %508 = sbr.rel (%p506) target = $region68
      $region67: #{feed_forward.1} parent=5 // pred_region
        %s509 = ssub.s32 %s19, 2
        // Predicated region
        $region69: #{feed_forward.1} parent=67 // pred_check
          %p510 = pneg %p158
        $region70: #{feed_forward.1} parent=67 // pred_check_branch
          %512 = sbr.rel (%p510) target = $region72
        $region71: #{feed_forward.1} parent=67 // pred_region
          %s513 = sand.u32 %s143, 1
          %s514 = scalar_lea.sflag [#allocation4], %s513
          %s515 = sand.u32 %s143, 1
          %s516 = smul.addr %s515, 8
          %s517 = scalar_lea.vmem [#allocation11], %s516
          %518 = dma.done %s514, 128
        $region72: #{feed_forward.1} parent=67 // pred_fallthru
          _
      $region68: #{feed_forward.1} parent=5 // pred_fallthru
        _
    $region6: #{feed_forward.1} parent=1 // loop_footer
      %s23 = sadd.s32 1, %s19
    $region7: #{feed_forward.1} parent=1 // loop_footer_branch
      %18 = sbr.rel target = $region3
    $region8: #{feed_forward.1} parent=1 // loop_exit
      _
    %519 = vsyncpa [#allocation3], 1
    %s520 = scalar_lea.sflag [#allocation3], 1
    %521 = vsyncpa %s520, 1
    %522 = vsyncpa [#allocation6], 1
    %523 = vsyncpa [#allocation9], 1
    %524 = vsyncpa [#allocation4], 1
    %s525 = scalar_lea.sflag [#allocation4], 1
    %526 = vsyncpa %s525, 1

</llo_original>
